<compile_context>
chip_gen: v6e
topology: v6e:2x2x1
jax: 0.10.0
libtpu: 0.0.40
codegen_flags: <defaults>
</compile_context>

<pallas_src>
import functools
import math

import jax
import jax.numpy as jnp
from jax.experimental import pallas as pl
from jax.experimental.pallas import tpu as pltpu


def _essa_kernel(x_ref, wq_ref, bq_ref, wk_ref, bk_ref, wv_ref, bv_ref,
                 wln_ref, bln_ref, o_ref, kv_acc, sq_acc, kv_bf, x_stash=None,
                 *, tn, n_total, use_stash):
    p = pl.program_id(1)   # 0: k/v accumulation pass, 1: q/output pass
    j = pl.program_id(2)   # N-tile index

    @pl.when(jnp.logical_and(p == 0, j == 0))
    def _zero_acc():
        kv_acc[...] = jnp.zeros_like(kv_acc)
        sq_acc[...] = jnp.zeros_like(sq_acc)

    @pl.when(p == 0)
    def _kv_pass():
        x_bf = x_ref[0].astype(jnp.bfloat16)                    # (C, TN)
        if use_stash:
            off = pl.multiple_of(j * tn, tn)
            x_stash[:, pl.ds(off, tn)] = x_bf                   # VMEM stash for pass 1
        k = jnp.dot(wk_ref[...], x_bf,
                    preferred_element_type=jnp.float32) + bk_ref[...]
        v = jnp.dot(wv_ref[...], x_bf,
                    preferred_element_type=jnp.float32) + bv_ref[...]
        k = k - jnp.mean(k, axis=0, keepdims=True)              # center over C
        k2 = k * k
        k2s = jnp.sum(k2, axis=0, keepdims=True)                # (1, TN)
        k2n = k2 * pl.reciprocal(k2s + 1e-7, approx=False)      # exact (EUP + NR)
        # kv_acc[a, b] += sum_n k2n[a, n] * v[b, n]
        kv_acc[...] += jax.lax.dot_general(
            k2n.astype(jnp.bfloat16), v.astype(jnp.bfloat16),
            (((1,), (1,)), ((), ())), preferred_element_type=jnp.float32)
        sq_acc[...] += jnp.sum(k2n * k2n, axis=1, keepdims=True)

    @pl.when(p == 1)
    def _q_pass():
        # Finalize kv once per batch: finish F.normalize(k2, dim=N) (per-row L2
        # rescale over ALL of N) and fold in the 1/sqrt(N) of t2.
        @pl.when(j == 0)
        def _finalize_kv():
            inv_knorm = jax.lax.rsqrt(jnp.maximum(sq_acc[...], 1e-24))   # (C, 1)
            kv_bf[...] = (kv_acc[...]
                          * (inv_knorm * (1.0 / math.sqrt(n_total)))
                          ).astype(jnp.bfloat16)

        if use_stash:
            off = pl.multiple_of(j * tn, tn)
            x_bf = x_stash[:, pl.ds(off, tn)]                   # no HBM re-read
        else:
            x_bf = x_ref[0].astype(jnp.bfloat16)
        v = jnp.dot(wv_ref[...], x_bf,
                    preferred_element_type=jnp.float32) + bv_ref[...]
        q = jnp.dot(wq_ref[...], x_bf,
                    preferred_element_type=jnp.float32) + bq_ref[...]
        q = q - jnp.mean(q, axis=0, keepdims=True)              # center over C
        q2 = q * q
        # F.normalize(q2/(q2s+eps), dim=C): the 1/(q2s+eps) scale is constant
        # along C so it cancels under the C-axis L2 normalize (only degenerate
        # all-zero rows differ; eps floor via max(sumsq, 1e-24)).
        q2n = q2 * jax.lax.rsqrt(
            jnp.maximum(jnp.sum(q2 * q2, axis=0, keepdims=True), 1e-24))
        # t2[b, n] = sum_a kv[a, b] * q2n[a, n]   (1/sqrt(N) already folded in)
        t2 = jax.lax.dot_general(
            kv_bf[...], q2n.astype(jnp.bfloat16),
            (((0,), (0,)), ((), ())), preferred_element_type=jnp.float32)
        attn = v + t2
        out = jnp.dot(wln_ref[...], attn.astype(jnp.bfloat16),
                      preferred_element_type=jnp.float32) + bln_ref[...]
        o_ref[0] = out.astype(o_ref.dtype)


def _vmem_capacity_bytes():
    try:
        info = pltpu.get_tpu_info()
        cap = getattr(info, "vmem_capacity_bytes", None)
        if cap:
            return int(cap)
    except Exception:
        pass
    return 64 * 1024 * 1024   # conservative fallback (v7x per-core VMEM)


def _pick_n_tile(n, c, max_tile_bytes):
    """Largest N tile (multiple of 128, dividing N) with C*TN*4 <= budget."""
    if c * n * 4 <= max_tile_bytes:
        return n                       # whole slab: fewest grid steps
    if n % 128 != 0:
        # TODO(synk): pad N to a multiple of 128 upstream for lane-dense stores.
        return n
    cap = max(128, ((max_tile_bytes // (c * 4)) // 128) * 128)
    best = 128
    t = 128
    while t <= min(cap, n):
        if n % t == 0:
            best = t
        t += 128
    return best


def essa_attn_pallas(x_nchw, wqkv, bqkv, wln, bln, *, max_tile_bytes=None):
    """x_nchw: (B, C, H, W) f32. wqkv: (C, 3C). bqkv: (3C,). wln: (C, C). bln: (C,).
    Computes qkv = x @ wqkv + bqkv (i.e. torch Linear with weight = wqkv.T)."""
    b, c, h, w = x_nchw.shape
    n = h * w

    # channels-major slabs: (B, C, N) is a pure reshape of NCHW (no transposes)
    x_bcn = x_nchw.reshape(b, c, n)

    # --- per-generation VMEM budget & byte-sized tile selection ---------------
    vmem_cap = _vmem_capacity_bytes()
    vmem_ceiling = int(0.45 * vmem_cap)          # ~28 MiB on v7x, ~57 MiB on v5e/v6e
    if max_tile_bytes is None:
        max_tile_bytes = min(2 * 1024 * 1024, max(vmem_ceiling // 16, 128 * c * 4))
    tn = _pick_n_tile(n, c, max_tile_bytes)
    nt = n // tn

    tile_bytes = c * tn * 4
    stash_bytes = c * n * 2                      # bf16 x stash
    weights_bytes = 4 * (c * c * 2) * 2 + 8 * c * 4
    fixed_bytes = c * c * 4 + c * 4 + c * c * 2  # kv_acc + sq_acc + kv_bf
    # x + out double-buffered (4x) + ~8 (C,TN) f32 compiler temporaries.
    est_wo_stash = 12 * tile_bytes + weights_bytes + fixed_bytes
    # With a single N tile the x block index is identical in both passes, so
    # Pallas never re-DMAs it anyway -> the stash is only useful for nt > 1.
    use_stash = (nt > 1) and (est_wo_stash + stash_bytes <= vmem_ceiling)
    est = est_wo_stash + (stash_bytes if use_stash else 0)
    vmem_limit = int(min(vmem_ceiling, max(2 * est, 16 * 1024 * 1024)))

    # --- weight prep (one-time, tiny): output-feature-major, NO fused slabs ---
    # Separate (C,C) matrices avoid in-kernel row slices that cross the (8,128)
    # sublane tile when C % 8 != 0, and avoid duplicated v rows.
    w_t = jnp.transpose(wqkv).astype(jnp.bfloat16)               # (3C, C): [q; k; v]
    w_q, w_k, w_v = w_t[:c], w_t[c:2 * c], w_t[2 * c:]
    b_q = bqkv[:c].reshape(c, 1).astype(jnp.float32)
    b_k = bqkv[c:2 * c].reshape(c, 1).astype(jnp.float32)
    b_v = bqkv[2 * c:].reshape(c, 1).astype(jnp.float32)
    wln_t = jnp.transpose(wln).astype(jnp.bfloat16)
    bln_c1 = bln.reshape(c, 1).astype(jnp.float32)

    const = lambda bi, p, j: (0, 0)
    if use_stash:
        # Pin the x block during pass 1 to the last pass-0 index so no new x
        # DMAs are issued; pass 1 reads the bf16 VMEM stash instead.
        last = nt - 1
        x_index = lambda bi, p, j: (bi, 0, j * (1 - p) + last * p)
    else:
        x_index = lambda bi, p, j: (bi, 0, j)
    # Output stays pinned at tile 0 during pass 0 (the resident block is never
    # written back before pass-1 j=0 overwrites it, because the block index is
    # unchanged at that transition); pass 1 writes every tile lane-dense.
    # NOTE: this relies on the (batch, pass, n_tile) grid order above.
    out_index = lambda bi, p, j: (bi, 0, p * j)

    scratch = [pltpu.VMEM((c, c), jnp.float32),      # kv accumulator
               pltpu.VMEM((c, 1), jnp.float32),      # sum_n k2n^2 per channel
               pltpu.VMEM((c, c), jnp.bfloat16)]     # finalized kv (bf16)
    if use_stash:
        scratch.append(pltpu.VMEM((c, n), jnp.bfloat16))   # bf16 x stash

    kernel = functools.partial(_essa_kernel, tn=tn, n_total=n, use_stash=use_stash)

    out_bcn = pl.pallas_call(
        kernel,
        out_shape=jax.ShapeDtypeStruct((b, c, n), x_bcn.dtype),
        grid_spec=pltpu.PrefetchScalarGridSpec(
            num_scalar_prefetch=0,
            grid=(b, 2, nt),
            in_specs=[
                pl.BlockSpec((1, c, tn), x_index),   # x tile
                pl.BlockSpec((c, c), const),         # w_q^T
                pl.BlockSpec((c, 1), const),         # b_q
                pl.BlockSpec((c, c), const),         # w_k^T
                pl.BlockSpec((c, 1), const),         # b_k
                pl.BlockSpec((c, c), const),         # w_v^T
                pl.BlockSpec((c, 1), const),         # b_v
                pl.BlockSpec((c, c), const),         # wln^T
                pl.BlockSpec((c, 1), const),         # bln
            ],
            out_specs=pl.BlockSpec((1, c, tn), out_index),
            scratch_shapes=scratch,
        ),
        compiler_params=pltpu.CompilerParams(
            # pass/N axes must stay serial (kv accumulation); batch is
            # megacore-parallel.
            dimension_semantics=("parallel", "arbitrary", "arbitrary"),
            vmem_limit_bytes=vmem_limit,
        ),
    )(x_bcn, w_q, b_q, w_k, b_k, w_v, b_v, wln_t, bln_c1)

    return out_bcn.reshape(b, c, h, w)


def essa_attn_ref(x_nchw, wqkv, bqkv, wln, bln):
    """Pure-JAX f32 reference mirroring the PyTorch forward."""
    b, c, h, w = x_nchw.shape
    n = h * w
    x = jnp.transpose(x_nchw.reshape(b, c, n), (0, 2, 1))          # (b, N, C)
    qkv = x @ wqkv + bqkv
    q, k, v = qkv[..., :c], qkv[..., c:2 * c], qkv[..., 2 * c:]
    q = q - jnp.mean(q, axis=2, keepdims=True)
    k = k - jnp.mean(k, axis=2, keepdims=True)
    q2, k2 = q * q, k * k
    q2s = jnp.sum(q2, axis=2, keepdims=True)
    k2s = jnp.sum(k2, axis=2, keepdims=True)
    k2 = k2 / (k2s + 1e-7)
    k2 = k2 / jnp.maximum(jnp.linalg.norm(k2, axis=-2, keepdims=True), 1e-12)
    q2 = q2 / (q2s + 1e-7)
    q2 = q2 / jnp.maximum(jnp.linalg.norm(q2, axis=-1, keepdims=True), 1e-12)
    t2 = (q2 @ (jnp.swapaxes(k2, -2, -1) @ v)) / math.sqrt(n)
    attn = (v + t2) @ wln + bln
    return jnp.transpose(attn.reshape(b, h, w, c), (0, 3, 1, 2))


def _make_inputs(key, b, c, h, w):
    kx, kw1, kb1, kw2, kb2 = jax.random.split(key, 5)
    bound = 1.0 / math.sqrt(c)
    x = jax.random.normal(kx, (b, c, h, w), dtype=jnp.float32)
    wqkv = jax.random.uniform(kw1, (c, 3 * c), jnp.float32, -bound, bound)
    bqkv = jax.random.uniform(kb1, (3 * c,), jnp.float32, -bound, bound)
    wln = jax.random.uniform(kw2, (c, c), jnp.float32, -bound, bound)
    bln = jax.random.uniform(kb2, (c,), jnp.float32, -bound, bound)
    return x, wqkv, bqkv, wln, bln


if __name__ == "__main__":
    k_main, k_multi = jax.random.split(jax.random.PRNGKey(0), 2)

    # Primary check: module-consistent small shape (single N tile per pass).
    B, C, H, W = 2, 4, 16, 16
    x, wqkv, bqkv, wln, bln = _make_inputs(k_main, B, C, H, W)
    out = jax.block_until_ready(essa_attn_pallas(x, wqkv, bqkv, wln, bln))
    ref = jax.block_until_ready(essa_attn_ref(x, wqkv, bqkv, wln, bln))
    assert out.shape == (B, C, H, W)
    # bf16 MXU operands vs. the pure-f32 reference.
    err = float(jnp.max(jnp.abs(out - ref)))
    assert err < 3e-2, err

    # Secondary check: force a small tile-byte budget so the multi-tile grid,
    # cross-tile accumulators, bf16 x stash and finalize-once paths all run.
    B2, C2, H2, W2 = 1, 8, 16, 16
    x2, wqkv2, bqkv2, wln2, bln2 = _make_inputs(k_multi, B2, C2, H2, W2)
    out2 = jax.block_until_ready(
        essa_attn_pallas(x2, wqkv2, bqkv2, wln2, bln2,
                         max_tile_bytes=C2 * 128 * 4))   # -> TN=128, 2 tiles
    ref2 = jax.block_until_ready(essa_attn_ref(x2, wqkv2, bqkv2, wln2, bln2))
    err2 = float(jnp.max(jnp.abs(out2 - ref2)))
    assert err2 < 3e-2, err2

    print("KERNEL_OK")
</pallas_src>

<mosaic_0001>
module attributes {stable_mosaic.version = 11 : i64} {
  func.func @_essa_kernel(%arg0: i32, %arg1: i32, %arg2: i32, %arg3: memref<1x4x256xf32, #tpu.memory_space<vmem>>, %arg4: memref<4x4xbf16, #tpu.memory_space<vmem>>, %arg5: memref<4x1xf32, #tpu.memory_space<vmem>>, %arg6: memref<4x4xbf16, #tpu.memory_space<vmem>>, %arg7: memref<4x1xf32, #tpu.memory_space<vmem>>, %arg8: memref<4x4xbf16, #tpu.memory_space<vmem>>, %arg9: memref<4x1xf32, #tpu.memory_space<vmem>>, %arg10: memref<4x4xbf16, #tpu.memory_space<vmem>>, %arg11: memref<4x1xf32, #tpu.memory_space<vmem>>, %arg12: memref<1x4x256xf32, #tpu.memory_space<vmem>>, %arg13: memref<4x4xf32, #tpu.memory_space<vmem>>, %arg14: memref<4x1xf32, #tpu.memory_space<vmem>>, %arg15: memref<4x4xbf16, #tpu.memory_space<vmem>>) attributes {dimension_semantics = [#tpu.dimension_semantics<parallel>, #tpu.dimension_semantics<arbitrary>, #tpu.dimension_semantics<arbitrary>], iteration_bounds = array<i64: 2, 2, 1>, scalar_prefetch = 0 : i64, scratch_operands = 3 : i64, tpu.core_type = #tpu.core_type<tc>, window_params = [{transform_indices = @transform_0, window_bounds = array<i64: 1, 4, 256>}, {pipeline_mode = #tpu.pipeline_mode<synchronous>, transform_indices = @transform_1, window_bounds = array<i64: 4, 4>}, {pipeline_mode = #tpu.pipeline_mode<synchronous>, transform_indices = @transform_2, window_bounds = array<i64: 4, 1>}, {pipeline_mode = #tpu.pipeline_mode<synchronous>, transform_indices = @transform_3, window_bounds = array<i64: 4, 4>}, {pipeline_mode = #tpu.pipeline_mode<synchronous>, transform_indices = @transform_4, window_bounds = array<i64: 4, 1>}, {pipeline_mode = #tpu.pipeline_mode<synchronous>, transform_indices = @transform_5, window_bounds = array<i64: 4, 4>}, {pipeline_mode = #tpu.pipeline_mode<synchronous>, transform_indices = @transform_6, window_bounds = array<i64: 4, 1>}, {pipeline_mode = #tpu.pipeline_mode<synchronous>, transform_indices = @transform_7, window_bounds = array<i64: 4, 4>}, {pipeline_mode = #tpu.pipeline_mode<synchronous>, transform_indices = @transform_8, window_bounds = array<i64: 4, 1>}, {transform_indices = @transform_9, window_bounds = array<i64: 1, 4, 256>}]} {
    %c0_i32 = arith.constant 0 : i32
    %0 = arith.cmpi eq, %arg1, %c0_i32 : i32
    %c0_i32_0 = arith.constant 0 : i32
    %1 = arith.cmpi eq, %arg2, %c0_i32_0 : i32
    %2 = arith.andi %0, %1 : i1
    %3 = arith.extui %2 : i1 to i32
    %c0_i32_1 = arith.constant 0 : i32
    %4 = arith.cmpi ne, %3, %c0_i32_1 : i32
    scf.if %4 {
      %cst = arith.constant 0.000000e+00 : f32
      %11 = vector.broadcast %cst : f32 to vector<4x4xf32>
      %c0 = arith.constant 0 : index
      %c0_5 = arith.constant 0 : index
      %12 = vector.load %arg13[%c0, %c0_5] : memref<4x4xf32, #tpu.memory_space<vmem>>, vector<4x4xf32>
      tpu.vector_store %arg13[%c0, %c0_5], %11 {strides = array<i32>} : memref<4x4xf32, #tpu.memory_space<vmem>>, vector<4x4xf32>,
      %cst_6 = arith.constant 0.000000e+00 : f32
      %13 = vector.broadcast %cst_6 : f32 to vector<4x1xf32>
      %c0_7 = arith.constant 0 : index
      %c0_8 = arith.constant 0 : index
      %14 = vector.load %arg14[%c0_7, %c0_8] : memref<4x1xf32, #tpu.memory_space<vmem>>, vector<4x1xf32>
      tpu.vector_store %arg14[%c0_7, %c0_8], %13 {strides = array<i32>} : memref<4x1xf32, #tpu.memory_space<vmem>>, vector<4x1xf32>,
    } else {
    }
    %c0_i32_2 = arith.constant 0 : i32
    %5 = arith.cmpi eq, %arg1, %c0_i32_2 : i32
    %6 = arith.extui %5 : i1 to i32
    %c0_i32_3 = arith.constant 0 : i32
    %7 = arith.cmpi ne, %6, %c0_i32_3 : i32
    scf.if %7 {
      %c0 = arith.constant 0 : index
      %c0_5 = arith.constant 0 : index
      %c0_6 = arith.constant 0 : index
      %11 = vector.load %arg3[%c0, %c0_5, %c0_6] : memref<1x4x256xf32, #tpu.memory_space<vmem>>, vector<1x4x256xf32>
      %12 = vector.shape_cast %11 : vector<1x4x256xf32> to vector<4x256xf32>
      %13 = arith.truncf %12 : vector<4x256xf32> to vector<4x256xbf16>
      %c0_7 = arith.constant 0 : index
      %c0_8 = arith.constant 0 : index
      %14 = vector.load %arg6[%c0_7, %c0_8] : memref<4x4xbf16, #tpu.memory_space<vmem>>, vector<4x4xbf16>
      %cst = arith.constant dense<0.000000e+00> : vector<4x256xf32>
      %15 = tpu.matmul %14, %13, %cst {dimension_numbers = #tpu.dot_dimension_numbers<[1], [0], [0], [1], [0, 0, 1, 1], [], []>} : vector<4x4xbf16>, vector<4x256xbf16>, vector<4x256xf32> -> vector<4x256xf32>
      %c0_9 = arith.constant 0 : index
      %c0_10 = arith.constant 0 : index
      %16 = vector.load %arg7[%c0_9, %c0_10] : memref<4x1xf32, #tpu.memory_space<vmem>>, vector<4x1xf32>
      %17 = vector.broadcast %16 : vector<4x1xf32> to vector<4x256xf32>
      %18 = arith.addf %15, %17 : vector<4x256xf32>
      %c0_11 = arith.constant 0 : index
      %c0_12 = arith.constant 0 : index
      %19 = vector.load %arg8[%c0_11, %c0_12] : memref<4x4xbf16, #tpu.memory_space<vmem>>, vector<4x4xbf16>
      %cst_13 = arith.constant dense<0.000000e+00> : vector<4x256xf32>
      %20 = tpu.matmul %19, %13, %cst_13 {dimension_numbers = #tpu.dot_dimension_numbers<[1], [0], [0], [1], [0, 0, 1, 1], [], []>} : vector<4x4xbf16>, vector<4x256xbf16>, vector<4x256xf32> -> vector<4x256xf32>
      %c0_14 = arith.constant 0 : index
      %c0_15 = arith.constant 0 : index
      %21 = vector.load %arg9[%c0_14, %c0_15] : memref<4x1xf32, #tpu.memory_space<vmem>>, vector<4x1xf32>
      %22 = vector.broadcast %21 : vector<4x1xf32> to vector<4x256xf32>
      %23 = arith.addf %20, %22 : vector<4x256xf32>
      %cst_16 = arith.constant dense<0.000000e+00> : vector<256xf32>
      %24 = vector.multi_reduction <add>, %18, %cst_16 [0] : vector<4x256xf32> to vector<256xf32>
      %25 = vector.shape_cast %24 : vector<256xf32> to vector<1x256xf32>
      %cst_17 = arith.constant 4.000000e+00 : f32
      %26 = vector.broadcast %cst_17 : f32 to vector<1x256xf32>
      %27 = arith.divf %25, %26 : vector<1x256xf32>
      %28 = vector.broadcast %27 : vector<1x256xf32> to vector<4x256xf32>
      %29 = arith.subf %18, %28 : vector<4x256xf32>
      %30 = arith.mulf %29, %29 : vector<4x256xf32>
      %cst_18 = arith.constant dense<0.000000e+00> : vector<256xf32>
      %31 = vector.multi_reduction <add>, %30, %cst_18 [0] : vector<4x256xf32> to vector<256xf32>
      %32 = vector.shape_cast %31 : vector<256xf32> to vector<1x256xf32>
      %cst_19 = arith.constant 1.000000e-07 : f32
      %33 = vector.broadcast %cst_19 : f32 to vector<1x256xf32>
      %34 = arith.addf %32, %33 : vector<1x256xf32>
      %35 = tpu.reciprocal %34 : vector<1x256xf32> -> vector<1x256xf32>
      %36 = vector.broadcast %35 : vector<1x256xf32> to vector<4x256xf32>
      %37 = arith.mulf %30, %36 : vector<4x256xf32>
      %c0_20 = arith.constant 0 : index
      %c0_21 = arith.constant 0 : index
      %38 = vector.load %arg13[%c0_20, %c0_21] : memref<4x4xf32, #tpu.memory_space<vmem>>, vector<4x4xf32>
      %39 = arith.truncf %37 : vector<4x256xf32> to vector<4x256xbf16>
      %40 = arith.truncf %23 : vector<4x256xf32> to vector<4x256xbf16>
      %cst_22 = arith.constant dense<0.000000e+00> : vector<4x4xf32>
      %41 = tpu.matmul %39, %40, %cst_22 {dimension_numbers = #tpu.dot_dimension_numbers<[1], [1], [0], [0], [0, 0, 1, 0], [], []>} : vector<4x256xbf16>, vector<4x256xbf16>, vector<4x4xf32> -> vector<4x4xf32>
      %42 = arith.addf %38, %41 : vector<4x4xf32>
      %c0_23 = arith.constant 0 : index
      %c0_24 = arith.constant 0 : index
      %43 = vector.load %arg13[%c0_23, %c0_24] : memref<4x4xf32, #tpu.memory_space<vmem>>, vector<4x4xf32>
      tpu.vector_store %arg13[%c0_23, %c0_24], %42 {strides = array<i32>} : memref<4x4xf32, #tpu.memory_space<vmem>>, vector<4x4xf32>,
      %c0_25 = arith.constant 0 : index
      %c0_26 = arith.constant 0 : index
      %44 = vector.load %arg14[%c0_25, %c0_26] : memref<4x1xf32, #tpu.memory_space<vmem>>, vector<4x1xf32>
      %45 = arith.mulf %37, %37 : vector<4x256xf32>
      %cst_27 = arith.constant dense<0.000000e+00> : vector<4xf32>
      %46 = vector.multi_reduction <add>, %45, %cst_27 [1] : vector<4x256xf32> to vector<4xf32>
      %47 = vector.shape_cast %46 : vector<4xf32> to vector<4x1xf32>
      %48 = arith.addf %44, %47 : vector<4x1xf32>
      %c0_28 = arith.constant 0 : index
      %c0_29 = arith.constant 0 : index
      %49 = vector.load %arg14[%c0_28, %c0_29] : memref<4x1xf32, #tpu.memory_space<vmem>>, vector<4x1xf32>
      tpu.vector_store %arg14[%c0_28, %c0_29], %48 {strides = array<i32>} : memref<4x1xf32, #tpu.memory_space<vmem>>, vector<4x1xf32>,
    } else {
    }
    %c1_i32 = arith.constant 1 : i32
    %8 = arith.cmpi eq, %arg1, %c1_i32 : i32
    %9 = arith.extui %8 : i1 to i32
    %c0_i32_4 = arith.constant 0 : i32
    %10 = arith.cmpi ne, %9, %c0_i32_4 : i32
    scf.if %10 {
      %c0_i32_5 = arith.constant 0 : i32
      %11 = arith.cmpi eq, %arg2, %c0_i32_5 : i32
      %12 = arith.extui %11 : i1 to i32
      %c0_i32_6 = arith.constant 0 : i32
      %13 = arith.cmpi ne, %12, %c0_i32_6 : i32
      scf.if %13 {
        %c0_33 = arith.constant 0 : index
        %c0_34 = arith.constant 0 : index
        %55 = vector.load %arg14[%c0_33, %c0_34] : memref<4x1xf32, #tpu.memory_space<vmem>>, vector<4x1xf32>
        %cst_35 = arith.constant 1.000000e-24 : f32
        %56 = vector.broadcast %cst_35 : f32 to vector<4x1xf32>
        %57 = arith.maximumf %55, %56 : vector<4x1xf32>
        %58 = math.rsqrt %57 : vector<4x1xf32>
        %c0_36 = arith.constant 0 : index
        %c0_37 = arith.constant 0 : index
        %59 = vector.load %arg13[%c0_36, %c0_37] : memref<4x4xf32, #tpu.memory_space<vmem>>, vector<4x4xf32>
        %cst_38 = arith.constant 6.250000e-02 : f32
        %60 = vector.broadcast %cst_38 : f32 to vector<4x1xf32>
        %61 = arith.mulf %58, %60 : vector<4x1xf32>
        %62 = vector.broadcast %61 : vector<4x1xf32> to vector<4x4xf32>
        %63 = arith.mulf %59, %62 : vector<4x4xf32>
        %64 = arith.truncf %63 : vector<4x4xf32> to vector<4x4xbf16>
        %c0_39 = arith.constant 0 : index
        %c0_40 = arith.constant 0 : index
        %65 = vector.load %arg15[%c0_39, %c0_40] : memref<4x4xbf16, #tpu.memory_space<vmem>>, vector<4x4xbf16>
        tpu.vector_store %arg15[%c0_39, %c0_40], %64 {strides = array<i32>} : memref<4x4xbf16, #tpu.memory_space<vmem>>, vector<4x4xbf16>,
      } else {
      }
      %c0 = arith.constant 0 : index
      %c0_7 = arith.constant 0 : index
      %c0_8 = arith.constant 0 : index
      %14 = vector.load %arg3[%c0, %c0_7, %c0_8] : memref<1x4x256xf32, #tpu.memory_space<vmem>>, vector<1x4x256xf32>
      %15 = vector.shape_cast %14 : vector<1x4x256xf32> to vector<4x256xf32>
      %16 = arith.truncf %15 : vector<4x256xf32> to vector<4x256xbf16>
      %c0_9 = arith.constant 0 : index
      %c0_10 = arith.constant 0 : index
      %17 = vector.load %arg8[%c0_9, %c0_10] : memref<4x4xbf16, #tpu.memory_space<vmem>>, vector<4x4xbf16>
      %cst = arith.constant dense<0.000000e+00> : vector<4x256xf32>
      %18 = tpu.matmul %17, %16, %cst {dimension_numbers = #tpu.dot_dimension_numbers<[1], [0], [0], [1], [0, 0, 1, 1], [], []>} : vector<4x4xbf16>, vector<4x256xbf16>, vector<4x256xf32> -> vector<4x256xf32>
      %c0_11 = arith.constant 0 : index
      %c0_12 = arith.constant 0 : index
      %19 = vector.load %arg9[%c0_11, %c0_12] : memref<4x1xf32, #tpu.memory_space<vmem>>, vector<4x1xf32>
      %20 = vector.broadcast %19 : vector<4x1xf32> to vector<4x256xf32>
      %21 = arith.addf %18, %20 : vector<4x256xf32>
      %c0_13 = arith.constant 0 : index
      %c0_14 = arith.constant 0 : index
      %22 = vector.load %arg4[%c0_13, %c0_14] : memref<4x4xbf16, #tpu.memory_space<vmem>>, vector<4x4xbf16>
      %cst_15 = arith.constant dense<0.000000e+00> : vector<4x256xf32>
      %23 = tpu.matmul %22, %16, %cst_15 {dimension_numbers = #tpu.dot_dimension_numbers<[1], [0], [0], [1], [0, 0, 1, 1], [], []>} : vector<4x4xbf16>, vector<4x256xbf16>, vector<4x256xf32> -> vector<4x256xf32>
      %c0_16 = arith.constant 0 : index
      %c0_17 = arith.constant 0 : index
      %24 = vector.load %arg5[%c0_16, %c0_17] : memref<4x1xf32, #tpu.memory_space<vmem>>, vector<4x1xf32>
      %25 = vector.broadcast %24 : vector<4x1xf32> to vector<4x256xf32>
      %26 = arith.addf %23, %25 : vector<4x256xf32>
      %cst_18 = arith.constant dense<0.000000e+00> : vector<256xf32>
      %27 = vector.multi_reduction <add>, %26, %cst_18 [0] : vector<4x256xf32> to vector<256xf32>
      %28 = vector.shape_cast %27 : vector<256xf32> to vector<1x256xf32>
      %cst_19 = arith.constant 4.000000e+00 : f32
      %29 = vector.broadcast %cst_19 : f32 to vector<1x256xf32>
      %30 = arith.divf %28, %29 : vector<1x256xf32>
      %31 = vector.broadcast %30 : vector<1x256xf32> to vector<4x256xf32>
      %32 = arith.subf %26, %31 : vector<4x256xf32>
      %33 = arith.mulf %32, %32 : vector<4x256xf32>
      %34 = arith.mulf %33, %33 : vector<4x256xf32>
      %cst_20 = arith.constant dense<0.000000e+00> : vector<256xf32>
      %35 = vector.multi_reduction <add>, %34, %cst_20 [0] : vector<4x256xf32> to vector<256xf32>
      %36 = vector.shape_cast %35 : vector<256xf32> to vector<1x256xf32>
      %cst_21 = arith.constant 1.000000e-24 : f32
      %37 = vector.broadcast %cst_21 : f32 to vector<1x256xf32>
      %38 = arith.maximumf %36, %37 : vector<1x256xf32>
      %39 = math.rsqrt %38 : vector<1x256xf32>
      %40 = vector.broadcast %39 : vector<1x256xf32> to vector<4x256xf32>
      %41 = arith.mulf %33, %40 : vector<4x256xf32>
      %c0_22 = arith.constant 0 : index
      %c0_23 = arith.constant 0 : index
      %42 = vector.load %arg15[%c0_22, %c0_23] : memref<4x4xbf16, #tpu.memory_space<vmem>>, vector<4x4xbf16>
      %43 = arith.truncf %41 : vector<4x256xf32> to vector<4x256xbf16>
      %cst_24 = arith.constant dense<0.000000e+00> : vector<4x256xf32>
      %44 = tpu.matmul %42, %43, %cst_24 {dimension_numbers = #tpu.dot_dimension_numbers<[0], [0], [1], [1], [0, 1, 1, 1], [], []>} : vector<4x4xbf16>, vector<4x256xbf16>, vector<4x256xf32> -> vector<4x256xf32>
      %45 = arith.addf %21, %44 : vector<4x256xf32>
      %c0_25 = arith.constant 0 : index
      %c0_26 = arith.constant 0 : index
      %46 = vector.load %arg10[%c0_25, %c0_26] : memref<4x4xbf16, #tpu.memory_space<vmem>>, vector<4x4xbf16>
      %47 = arith.truncf %45 : vector<4x256xf32> to vector<4x256xbf16>
      %cst_27 = arith.constant dense<0.000000e+00> : vector<4x256xf32>
      %48 = tpu.matmul %46, %47, %cst_27 {dimension_numbers = #tpu.dot_dimension_numbers<[1], [0], [0], [1], [0, 0, 1, 1], [], []>} : vector<4x4xbf16>, vector<4x256xbf16>, vector<4x256xf32> -> vector<4x256xf32>
      %c0_28 = arith.constant 0 : index
      %c0_29 = arith.constant 0 : index
      %49 = vector.load %arg11[%c0_28, %c0_29] : memref<4x1xf32, #tpu.memory_space<vmem>>, vector<4x1xf32>
      %50 = vector.broadcast %49 : vector<4x1xf32> to vector<4x256xf32>
      %51 = arith.addf %48, %50 : vector<4x256xf32>
      %c0_30 = arith.constant 0 : index
      %c0_31 = arith.constant 0 : index
      %c0_32 = arith.constant 0 : index
      %52 = vector.load %arg12[%c0_30, %c0_31, %c0_32] : memref<1x4x256xf32, #tpu.memory_space<vmem>>, vector<1x4x256xf32>
      %53 = vector.shape_cast %52 : vector<1x4x256xf32> to vector<4x256xf32>
      %54 = vector.shape_cast %51 : vector<4x256xf32> to vector<1x4x256xf32>
      tpu.vector_store %arg12[%c0_30, %c0_31, %c0_32], %54 {strides = array<i32>} : memref<1x4x256xf32, #tpu.memory_space<vmem>>, vector<1x4x256xf32>,
    } else {
    }
    return
  }
  func.func @transform_0(%arg0: i32, %arg1: i32, %arg2: i32) -> (i32, i32, i32) {
    %c0_i32 = arith.constant 0 : i32
    %c0_i32_0 = arith.constant 0 : i32
    return %arg0, %c0_i32, %arg2 : i32, i32, i32
  }
  func.func @transform_1(%arg0: i32, %arg1: i32, %arg2: i32) -> (i32, i32) {
    %c0_i32 = arith.constant 0 : i32
    %c0_i32_0 = arith.constant 0 : i32
    %c0_i32_1 = arith.constant 0 : i32
    return %c0_i32, %c0_i32_0 : i32, i32
  }
  func.func @transform_2(%arg0: i32, %arg1: i32, %arg2: i32) -> (i32, i32) {
    %c0_i32 = arith.constant 0 : i32
    %c0_i32_0 = arith.constant 0 : i32
    %c0_i32_1 = arith.constant 0 : i32
    return %c0_i32, %c0_i32_0 : i32, i32
  }
  func.func @transform_3(%arg0: i32, %arg1: i32, %arg2: i32) -> (i32, i32) {
    %c0_i32 = arith.constant 0 : i32
    %c0_i32_0 = arith.constant 0 : i32
    %c0_i32_1 = arith.constant 0 : i32
    return %c0_i32, %c0_i32_0 : i32, i32
  }
  func.func @transform_4(%arg0: i32, %arg1: i32, %arg2: i32) -> (i32, i32) {
    %c0_i32 = arith.constant 0 : i32
    %c0_i32_0 = arith.constant 0 : i32
    %c0_i32_1 = arith.constant 0 : i32
    return %c0_i32, %c0_i32_0 : i32, i32
  }
  func.func @transform_5(%arg0: i32, %arg1: i32, %arg2: i32) -> (i32, i32) {
    %c0_i32 = arith.constant 0 : i32
    %c0_i32_0 = arith.constant 0 : i32
    %c0_i32_1 = arith.constant 0 : i32
    return %c0_i32, %c0_i32_0 : i32, i32
  }
  func.func @transform_6(%arg0: i32, %arg1: i32, %arg2: i32) -> (i32, i32) {
    %c0_i32 = arith.constant 0 : i32
    %c0_i32_0 = arith.constant 0 : i32
    %c0_i32_1 = arith.constant 0 : i32
    return %c0_i32, %c0_i32_0 : i32, i32
  }
  func.func @transform_7(%arg0: i32, %arg1: i32, %arg2: i32) -> (i32, i32) {
    %c0_i32 = arith.constant 0 : i32
    %c0_i32_0 = arith.constant 0 : i32
    %c0_i32_1 = arith.constant 0 : i32
    return %c0_i32, %c0_i32_0 : i32, i32
  }
  func.func @transform_8(%arg0: i32, %arg1: i32, %arg2: i32) -> (i32, i32) {
    %c0_i32 = arith.constant 0 : i32
    %c0_i32_0 = arith.constant 0 : i32
    %c0_i32_1 = arith.constant 0 : i32
    return %c0_i32, %c0_i32_0 : i32, i32
  }
  func.func @transform_9(%arg0: i32, %arg1: i32, %arg2: i32) -> (i32, i32, i32) {
    %0 = arith.muli %arg1, %arg2 : i32
    %c0_i32 = arith.constant 0 : i32
    %c0_i32_0 = arith.constant 0 : i32
    return %arg0, %c0_i32, %0 : i32, i32, i32
  }
}

</mosaic_0001>

<llo_original>
// kernel: tpu_custom_call.1
$region0: #{tpu_custom_call.1}
  #allocation0 [shape = 'u32[]', space=smem, size = 0x4, offset = 0x4, fixed_abs, tag = 'smem constant byte address 0x4 - core index']
  #allocation1 [shape = 'u32[144,128]{1,0:T(1,128)}', space=vmem, size = 0x12000, scoped, tag = 'internal scratch']
  #allocation2 [shape = 'f32[4,4]{1,0:T(4,128)}', space=vmem, size = 0x800, scoped, tag = 'scratch operand']
  #allocation3 [shape = 'f32[4,1]{1,0:T(4,128)}', space=vmem, size = 0x800, scoped, tag = 'scratch operand']
  #allocation4 [shape = 'bf16[4,4]{1,0:T(4,128)(2,1)}', space=vmem, size = 0x400, scoped, tag = 'scratch operand']
  %s0 = inlined_call_operand.vmem [shape: f32[2,4,256], index: 0, kind: input, shape index: {}]
  %s1 = inlined_call_operand.vmem [shape: bf16[4,4], index: 1, kind: input, shape index: {}]
  %s2 = inlined_call_operand.vmem [shape: f32[4,1], index: 2, kind: input, shape index: {}]
  %s3 = inlined_call_operand.vmem [shape: bf16[4,4], index: 3, kind: input, shape index: {}]
  %s4 = inlined_call_operand.vmem [shape: f32[4,1], index: 4, kind: input, shape index: {}]
  %s5 = inlined_call_operand.vmem [shape: bf16[4,4], index: 5, kind: input, shape index: {}]
  %s6 = inlined_call_operand.vmem [shape: f32[4,1], index: 6, kind: input, shape index: {}]
  %s7 = inlined_call_operand.vmem [shape: bf16[4,4], index: 7, kind: input, shape index: {}]
  %s8 = inlined_call_operand.vmem [shape: f32[4,1], index: 8, kind: input, shape index: {}]
  %s9 = inlined_call_operand.hbm [shape: f32[2,4,256], index: 9, kind: output, shape index: {}]
  %s10 = sld [smem:[#allocation0]]
  $region85: #{tpu_custom_call.1} parent=0
    _
  %s12 = ssub.s32 1, %s10
  %s13 = scalar_select 0, %s12, %s10
  $region1: #{tpu_custom_call.1} parent=0
    #allocation5 [shape = 'u8[8192]{0}', space=vmem, size = 0x2000, scoped, tag = 'output window, operand 0']
    #allocation6 [shape = 's32[2]{0}', space=sflag, size = 0x8, scoped, tag = 'scoped memory for tpu_custom_call.1']
    %14 = vsyncpa [#allocation6], 0
    %s15 = scalar_lea.sflag [#allocation6], 1
    %16 = vsyncpa %s15, 0
    loop: start=0, step=1, limit=6
    $region2: #{tpu_custom_call.1} parent=1 // loop_pre_header
      _
    $region3: #{tpu_custom_call.1} parent=1 // loop_header
      %s18 = sphi 0, %s22
      %p19 = scmp.ge.s32.totalorder %s18, 6
      %s25 = sphi 0, %s44
      %s26 = sphi 0, %s40
      %s27 = sphi 0, %s36
      %s28 = sphi 0, %s25
      %s29 = sphi 0, %s26
      %s30 = sphi 0, %s27
      %s31 = sphi 0, %s28
      %s32 = sphi 0, %s29
      %s33 = sphi 0, %s30
      %s49 = sphi 0, %s51
      %s52 = sphi 0, %s49
      %s53 = sphi 0, %s52
      %s69 = sphi 0, %s53
      %s73 = sphi 0, %s73
      %s75 = sphi 0, %s73
      %s76 = sphi 0, %s75
      %s90 = sphi 0, %s76
      %s94 = sphi 0, %s94
      %s96 = sphi 0, %s94
      %s97 = sphi 0, %s96
      %s111 = sphi 0, %s97
      %s115 = sphi 0, %s115
      %s117 = sphi 0, %s115
      %s118 = sphi 0, %s117
      %s132 = sphi 0, %s118
      %s136 = sphi 0, %s136
      %s138 = sphi 0, %s136
      %s139 = sphi 0, %s138
      %s153 = sphi 0, %s139
      %s157 = sphi 0, %s157
      %s159 = sphi 0, %s157
      %s160 = sphi 0, %s159
      %s174 = sphi 0, %s160
      %s178 = sphi 0, %s178
      %s180 = sphi 0, %s178
      %s181 = sphi 0, %s180
      %s195 = sphi 0, %s181
      %s199 = sphi 0, %s199
      %s201 = sphi 0, %s199
      %s202 = sphi 0, %s201
      %s216 = sphi 0, %s202
      %s220 = sphi 0, %s220
      %s222 = sphi 0, %s220
      %s223 = sphi 0, %s222
      %s237 = sphi 0, %s223
      %s247 = sphi 0, %s249
      %s250 = sphi 0, %s247
      %s251 = sphi 0, %s250
      %s267 = sphi 0, %s251
    $region4: #{tpu_custom_call.1} parent=1 // loop_header_branch
      %21 = sbr.rel (%p19) target = $region8
    $region5: #{tpu_custom_call.1} parent=1 // loop_body
      %s23 = ssub.s32 %s18, 1
      %s24 = ssub.s32 %s18, 2
      %s34 = sadd.s32 1, %s27
      %p35 = scmp.ge.s32.totalorder %s34, 1
      %s36 = scalar_select %p35, 0, %s34
      %s37 = sadd.s32 1, %s26
      %s38 = scalar_select %p35, %s37, %s26
      %p39 = scmp.ge.s32.totalorder %s38, 2
      %s40 = scalar_select %p39, 0, %s38
      %s41 = sadd.s32 1, %s25
      %s42 = scalar_select %p39, %s41, %s25
      %p43 = scmp.ge.s32.totalorder %s42, 2
      %s44 = scalar_select %p43, 0, %s42
      %s45 = ssub.s32 %s25, %s44
      %s46 = ssub.s32 %s27, %s36
      %s47 = sor.u32 %s45, %s46
      %p48 = scmp.eq.s32.totalorder %s47, 0
      %s50 = sadd.s32 %s49, 1
      %s51 = scalar_select %p48, %s49, %s50
      %p54 = pneg %p48
      %p55 = scmp.eq.s32.totalorder %s18, 3
      %p56 = por %p54, %p55
      %p57 = scmp.ne.s32.totalorder %s49, %s52
      %p58 = scmp.eq.s32.totalorder %s18, 0
      %p59 = por %p57, %p58
      %p60 = scmp.ne.s32.totalorder %s49, %s52
      %p61 = scmp.eq.s32.totalorder %s23, 3
      %p62 = por %p60, %p61
      %p63 = scmp.ne.s32.totalorder %s52, %s53
      %p64 = scmp.eq.s32.totalorder %s23, 0
      %p65 = por %p63, %p64
      %p66 = scmp.ne.s32.totalorder %s52, %s53
      %p67 = scmp.eq.s32.totalorder %s24, 3
      %p68 = por %p66, %p67
      %p70 = scmp.ne.s32.totalorder %s53, %s69
      %p71 = scmp.eq.s32.totalorder %s24, 0
      %p72 = por %p70, %p71
      %s74 = sadd.s32 %s73, 1
      %p77 = scmp.eq.s32.totalorder %s18, 3
      %p78 = scmp.ne.s32.totalorder %s73, %s75
      %p79 = scmp.eq.s32.totalorder %s18, 0
      %p80 = por %p78, %p79
      %p81 = scmp.ne.s32.totalorder %s73, %s75
      %p82 = scmp.eq.s32.totalorder %s23, 3
      %p83 = por %p81, %p82
      %p84 = scmp.ne.s32.totalorder %s75, %s76
      %p85 = scmp.eq.s32.totalorder %s23, 0
      %p86 = por %p84, %p85
      %p87 = scmp.ne.s32.totalorder %s75, %s76
      %p88 = scmp.eq.s32.totalorder %s24, 3
      %p89 = por %p87, %p88
      %p91 = scmp.ne.s32.totalorder %s76, %s90
      %p92 = scmp.eq.s32.totalorder %s24, 0
      %p93 = por %p91, %p92
      %s95 = sadd.s32 %s94, 1
      %p98 = scmp.eq.s32.totalorder %s18, 3
      %p99 = scmp.ne.s32.totalorder %s94, %s96
      %p100 = scmp.eq.s32.totalorder %s18, 0
      %p101 = por %p99, %p100
      %p102 = scmp.ne.s32.totalorder %s94, %s96
      %p103 = scmp.eq.s32.totalorder %s23, 3
      %p104 = por %p102, %p103
      %p105 = scmp.ne.s32.totalorder %s96, %s97
      %p106 = scmp.eq.s32.totalorder %s23, 0
      %p107 = por %p105, %p106
      %p108 = scmp.ne.s32.totalorder %s96, %s97
      %p109 = scmp.eq.s32.totalorder %s24, 3
      %p110 = por %p108, %p109
      %p112 = scmp.ne.s32.totalorder %s97, %s111
      %p113 = scmp.eq.s32.totalorder %s24, 0
      %p114 = por %p112, %p113
      %s116 = sadd.s32 %s115, 1
      %p119 = scmp.eq.s32.totalorder %s18, 3
      %p120 = scmp.ne.s32.totalorder %s115, %s117
      %p121 = scmp.eq.s32.totalorder %s18, 0
      %p122 = por %p120, %p121
      %p123 = scmp.ne.s32.totalorder %s115, %s117
      %p124 = scmp.eq.s32.totalorder %s23, 3
      %p125 = por %p123, %p124
      %p126 = scmp.ne.s32.totalorder %s117, %s118
      %p127 = scmp.eq.s32.totalorder %s23, 0
      %p128 = por %p126, %p127
      %p129 = scmp.ne.s32.totalorder %s117, %s118
      %p130 = scmp.eq.s32.totalorder %s24, 3
      %p131 = por %p129, %p130
      %p133 = scmp.ne.s32.totalorder %s118, %s132
      %p134 = scmp.eq.s32.totalorder %s24, 0
      %p135 = por %p133, %p134
      %s137 = sadd.s32 %s136, 1
      %p140 = scmp.eq.s32.totalorder %s18, 3
      %p141 = scmp.ne.s32.totalorder %s136, %s138
      %p142 = scmp.eq.s32.totalorder %s18, 0
      %p143 = por %p141, %p142
      %p144 = scmp.ne.s32.totalorder %s136, %s138
      %p145 = scmp.eq.s32.totalorder %s23, 3
      %p146 = por %p144, %p145
      %p147 = scmp.ne.s32.totalorder %s138, %s139
      %p148 = scmp.eq.s32.totalorder %s23, 0
      %p149 = por %p147, %p148
      %p150 = scmp.ne.s32.totalorder %s138, %s139
      %p151 = scmp.eq.s32.totalorder %s24, 3
      %p152 = por %p150, %p151
      %p154 = scmp.ne.s32.totalorder %s139, %s153
      %p155 = scmp.eq.s32.totalorder %s24, 0
      %p156 = por %p154, %p155
      %s158 = sadd.s32 %s157, 1
      %p161 = scmp.eq.s32.totalorder %s18, 3
      %p162 = scmp.ne.s32.totalorder %s157, %s159
      %p163 = scmp.eq.s32.totalorder %s18, 0
      %p164 = por %p162, %p163
      %p165 = scmp.ne.s32.totalorder %s157, %s159
      %p166 = scmp.eq.s32.totalorder %s23, 3
      %p167 = por %p165, %p166
      %p168 = scmp.ne.s32.totalorder %s159, %s160
      %p169 = scmp.eq.s32.totalorder %s23, 0
      %p170 = por %p168, %p169
      %p171 = scmp.ne.s32.totalorder %s159, %s160
      %p172 = scmp.eq.s32.totalorder %s24, 3
      %p173 = por %p171, %p172
      %p175 = scmp.ne.s32.totalorder %s160, %s174
      %p176 = scmp.eq.s32.totalorder %s24, 0
      %p177 = por %p175, %p176
      %s179 = sadd.s32 %s178, 1
      %p182 = scmp.eq.s32.totalorder %s18, 3
      %p183 = scmp.ne.s32.totalorder %s178, %s180
      %p184 = scmp.eq.s32.totalorder %s18, 0
      %p185 = por %p183, %p184
      %p186 = scmp.ne.s32.totalorder %s178, %s180
      %p187 = scmp.eq.s32.totalorder %s23, 3
      %p188 = por %p186, %p187
      %p189 = scmp.ne.s32.totalorder %s180, %s181
      %p190 = scmp.eq.s32.totalorder %s23, 0
      %p191 = por %p189, %p190
      %p192 = scmp.ne.s32.totalorder %s180, %s181
      %p193 = scmp.eq.s32.totalorder %s24, 3
      %p194 = por %p192, %p193
      %p196 = scmp.ne.s32.totalorder %s181, %s195
      %p197 = scmp.eq.s32.totalorder %s24, 0
      %p198 = por %p196, %p197
      %s200 = sadd.s32 %s199, 1
      %p203 = scmp.eq.s32.totalorder %s18, 3
      %p204 = scmp.ne.s32.totalorder %s199, %s201
      %p205 = scmp.eq.s32.totalorder %s18, 0
      %p206 = por %p204, %p205
      %p207 = scmp.ne.s32.totalorder %s199, %s201
      %p208 = scmp.eq.s32.totalorder %s23, 3
      %p209 = por %p207, %p208
      %p210 = scmp.ne.s32.totalorder %s201, %s202
      %p211 = scmp.eq.s32.totalorder %s23, 0
      %p212 = por %p210, %p211
      %p213 = scmp.ne.s32.totalorder %s201, %s202
      %p214 = scmp.eq.s32.totalorder %s24, 3
      %p215 = por %p213, %p214
      %p217 = scmp.ne.s32.totalorder %s202, %s216
      %p218 = scmp.eq.s32.totalorder %s24, 0
      %p219 = por %p217, %p218
      %s221 = sadd.s32 %s220, 1
      %p224 = scmp.eq.s32.totalorder %s18, 3
      %p225 = scmp.ne.s32.totalorder %s220, %s222
      %p226 = scmp.eq.s32.totalorder %s18, 0
      %p227 = por %p225, %p226
      %p228 = scmp.ne.s32.totalorder %s220, %s222
      %p229 = scmp.eq.s32.totalorder %s23, 3
      %p230 = por %p228, %p229
      %p231 = scmp.ne.s32.totalorder %s222, %s223
      %p232 = scmp.eq.s32.totalorder %s23, 0
      %p233 = por %p231, %p232
      %p234 = scmp.ne.s32.totalorder %s222, %s223
      %p235 = scmp.eq.s32.totalorder %s24, 3
      %p236 = por %p234, %p235
      %p238 = scmp.ne.s32.totalorder %s223, %s237
      %p239 = scmp.eq.s32.totalorder %s24, 0
      %p240 = por %p238, %p239
      %s241 = smul.u32 %s26, %s27
      %s242 = smul.u32 %s40, %s36
      %s243 = ssub.s32 %s25, %s44
      %s244 = ssub.s32 %s241, %s242
      %s245 = sor.u32 %s243, %s244
      %p246 = scmp.eq.s32.totalorder %s245, 0
      %s248 = sadd.s32 %s247, 1
      %s249 = scalar_select %p246, %s247, %s248
      %p252 = pneg %p246
      %p253 = scmp.eq.s32.totalorder %s18, 3
      %p254 = por %p252, %p253
      %p255 = scmp.ne.s32.totalorder %s247, %s250
      %p256 = scmp.eq.s32.totalorder %s18, 0
      %p257 = por %p255, %p256
      %p258 = scmp.ne.s32.totalorder %s247, %s250
      %p259 = scmp.eq.s32.totalorder %s23, 3
      %p260 = por %p258, %p259
      %p261 = scmp.ne.s32.totalorder %s250, %s251
      %p262 = scmp.eq.s32.totalorder %s23, 0
      %p263 = por %p261, %p262
      %p264 = scmp.ne.s32.totalorder %s250, %s251
      %p265 = scmp.eq.s32.totalorder %s24, 3
      %p266 = por %p264, %p265
      %p268 = scmp.ne.s32.totalorder %s251, %s267
      %p269 = scmp.eq.s32.totalorder %s24, 0
      %p270 = por %p268, %p269
      %p271 = scmp.le.s32.totalorder 1, %s18
      %p272 = scmp.lt.s32.totalorder %s18, 5
      %p273 = pnand %p271, %p272
      %p274 = pneg %p273
      // Predicated region
      $region9: #{tpu_custom_call.1} parent=5 // pred_check
        _
      $region10: #{tpu_custom_call.1} parent=5 // pred_check_branch
        %276 = sbr.rel (%p273) target = $region12
      $region11: #{tpu_custom_call.1} parent=5 // pred_region
        %s277 = ssub.s32 %s18, 1
        // Predicated region
        $region13: #{tpu_custom_call.1} parent=11 // pred_check
          %p278 = pneg %p86
        $region14: #{tpu_custom_call.1} parent=11 // pred_check_branch
          %280 = sbr.rel (%p278) target = $region16
        $region15: #{tpu_custom_call.1} parent=11 // pred_region
          _
        $region16: #{tpu_custom_call.1} parent=11 // pred_fallthru
          _
        // Predicated region
        $region17: #{tpu_custom_call.1} parent=11 // pred_check
          %p281 = pneg %p107
        $region18: #{tpu_custom_call.1} parent=11 // pred_check_branch
          %283 = sbr.rel (%p281) target = $region20
        $region19: #{tpu_custom_call.1} parent=11 // pred_region
          _
        $region20: #{tpu_custom_call.1} parent=11 // pred_fallthru
          _
        // Predicated region
        $region21: #{tpu_custom_call.1} parent=11 // pred_check
          %p284 = pneg %p128
        $region22: #{tpu_custom_call.1} parent=11 // pred_check_branch
          %286 = sbr.rel (%p284) target = $region24
        $region23: #{tpu_custom_call.1} parent=11 // pred_region
          _
        $region24: #{tpu_custom_call.1} parent=11 // pred_fallthru
          _
        // Predicated region
        $region25: #{tpu_custom_call.1} parent=11 // pred_check
          %p287 = pneg %p149
        $region26: #{tpu_custom_call.1} parent=11 // pred_check_branch
          %289 = sbr.rel (%p287) target = $region28
        $region27: #{tpu_custom_call.1} parent=11 // pred_region
          _
        $region28: #{tpu_custom_call.1} parent=11 // pred_fallthru
          _
        // Predicated region
        $region29: #{tpu_custom_call.1} parent=11 // pred_check
          %p290 = pneg %p170
        $region30: #{tpu_custom_call.1} parent=11 // pred_check_branch
          %292 = sbr.rel (%p290) target = $region32
        $region31: #{tpu_custom_call.1} parent=11 // pred_region
          _
        $region32: #{tpu_custom_call.1} parent=11 // pred_fallthru
          _
        // Predicated region
        $region33: #{tpu_custom_call.1} parent=11 // pred_check
          %p293 = pneg %p191
        $region34: #{tpu_custom_call.1} parent=11 // pred_check_branch
          %295 = sbr.rel (%p293) target = $region36
        $region35: #{tpu_custom_call.1} parent=11 // pred_region
          _
        $region36: #{tpu_custom_call.1} parent=11 // pred_fallthru
          _
        // Predicated region
        $region37: #{tpu_custom_call.1} parent=11 // pred_check
          %p296 = pneg %p212
        $region38: #{tpu_custom_call.1} parent=11 // pred_check_branch
          %298 = sbr.rel (%p296) target = $region40
        $region39: #{tpu_custom_call.1} parent=11 // pred_region
          _
        $region40: #{tpu_custom_call.1} parent=11 // pred_fallthru
          _
        // Predicated region
        $region41: #{tpu_custom_call.1} parent=11 // pred_check
          %p299 = pneg %p233
        $region42: #{tpu_custom_call.1} parent=11 // pred_check_branch
          %301 = sbr.rel (%p299) target = $region44
        $region43: #{tpu_custom_call.1} parent=11 // pred_region
          _
        $region44: #{tpu_custom_call.1} parent=11 // pred_fallthru
          _
      $region12: #{tpu_custom_call.1} parent=5 // pred_fallthru
        _
      %p302 = scmp.lt.s32.totalorder %s18, 4
      // Predicated region
      $region45: #{tpu_custom_call.1} parent=5 // pred_check
        %p303 = pneg %p302
      $region46: #{tpu_custom_call.1} parent=5 // pred_check_branch
        %305 = sbr.rel (%p303) target = $region48
      $region47: #{tpu_custom_call.1} parent=5 // pred_region
        // Predicated region
        $region49: #{tpu_custom_call.1} parent=47 // pred_check
          %p306 = pneg %p59
        $region50: #{tpu_custom_call.1} parent=47 // pred_check_branch
          %308 = sbr.rel (%p306) target = $region52
        $region51: #{tpu_custom_call.1} parent=47 // pred_region
          %s309 = smul.u32 2, %s27
          %p310 = scmp.lt.s32.totalorder %s25, 1
          %s311 = scalar_select %p310, %s25, 1
          %p312 = scmp.lt.s32.totalorder %s309, 1
          %s313 = scalar_select %p312, %s309, 1
          %s314 = smul.addr %s311, 2
          %s315 = sadd.s32 %s313, %s314
          %s316 = smul.addr %s315, 4
          %s317 = scalar_lea.vmem %s0, %s316
          %s318 = smul.u32 2, %s27
        $region52: #{tpu_custom_call.1} parent=47 // pred_fallthru
          _
      $region48: #{tpu_custom_call.1} parent=5 // pred_fallthru
        _
      %p319 = scmp.le.s32.totalorder 1, %s18
      %p320 = scmp.lt.s32.totalorder %s18, 5
      %p321 = pnand %p319, %p320
      %p322 = pneg %p321
      // Predicated region
      $region53: #{tpu_custom_call.1} parent=5 // pred_check
        _
      $region54: #{tpu_custom_call.1} parent=5 // pred_check_branch
        %324 = sbr.rel (%p321) target = $region56
      $region55: #{tpu_custom_call.1} parent=5 // pred_region
        %s325 = ssub.s32 %s18, 1
        %s326 = smul.u32 2, %s30
        %p327 = scmp.lt.s32.totalorder %s28, 1
        %s328 = scalar_select %p327, %s28, 1
        %p329 = scmp.lt.s32.totalorder %s326, 1
        %s330 = scalar_select %p329, %s326, 1
        %s331 = smul.addr %s328, 2
        %s332 = sadd.s32 %s330, %s331
        %s333 = smul.addr %s332, 4
        %s334 = scalar_lea.vmem %s0, %s333
        %p335 = pneg %p65
        %p336 = pneg %p62
        %p337 = pneg %p86
        %p338 = pneg %p83
        %p339 = pneg %p107
        %p340 = pneg %p104
        %p341 = pneg %p128
        %p342 = pneg %p125
        %p343 = pneg %p149
        %p344 = pneg %p146
        %p345 = pneg %p170
        %p346 = pneg %p167
        %p347 = pneg %p191
        %p348 = pneg %p188
        %p349 = pneg %p212
        %p350 = pneg %p209
        %p351 = pneg %p233
        %p352 = pneg %p230
        %p353 = pneg %p263
        %p354 = pneg %p260
        %s355 = sand.u32 %s250, 1
        %s356 = scalar_lea.sflag [#allocation6], %s355
        %s357 = sand.u32 %s250, 1
        %s358 = smul.addr %s357, 8
        %s359 = scalar_lea.vmem [#allocation5], %s358
        %s360 = smul.u32 2, %s30
        %p361 = scmp.lt.s32.totalorder %s28, 1
        %s362 = scalar_select %p361, %s28, 1
        %p363 = scmp.lt.s32.totalorder %s360, 1
        %s364 = scalar_select %p363, %s360, 1
        %s365 = smul.addr %s362, 2
        %s366 = sadd.s32 %s364, %s365
        %s367 = smul.addr %s366, 4
        %s368 = scalar_lea.vmem %s0, %s367
        %s369 = smul.u32 2, %s30
        %s370 = smul.u32 %s29, %s30
        %s371 = smul.u32 2, %s370
        %p373 = scmp.eq.s32.totalorder %s29, 0
        %p374 = scmp.eq.s32.totalorder %s30, 0
        %p375 = pnand %p373, %p374
        %p376 = pneg %p375
        // Predicated region
        $region57: #{tpu_custom_call.1} parent=55 // pred_check
          _
        $region58: #{tpu_custom_call.1} parent=55 // pred_check_branch
          %378 = sbr.rel (%p375) target = $region60
        $region59: #{tpu_custom_call.1} parent=55 // pred_region
          %vm379 = vcmask 27648
          %380 = vst.msk [vmem:[#allocation2] sm:$0xf] %vm379, 0.0
          %vm381 = vcmask 3072
          %382 = vst.msk [vmem:[#allocation3] sm:$0xf] %vm381, 0.0
        $region60: #{tpu_custom_call.1} parent=55 // pred_fallthru
          _
        // Predicated region
        $region61: #{tpu_custom_call.1} parent=55 // pred_check
          %p383 = pneg %p373
        $region62: #{tpu_custom_call.1} parent=55 // pred_check_branch
          %385 = sbr.rel (%p383) target = $region64
        $region63: #{tpu_custom_call.1} parent=55 // pred_region
          %v386 = vld [vmem:[%s368] sm:$0xff]
          %v388 = vcombine.high %v386, %v386
          %v390 = vpack.c.bf16 %v386, %v386
          %v391 = vpack.c.bf16 %v388, %v388
          %v392 = vld [vmem:[%s3] sm:$0x3]
          %v393 = vld [vmem:[%s4] sm:$0xf]
          %395 = vset.pattern.permute.xlu0 0
          %396 = vperm.xlu0 %395, %v393
          %v397 = vpop.permute.xlu0 %396
          %vm399 = vcmask 31744
          %v401 = vsel %vm399, %v392, 0
          %vm403 = vcmask 1041408
          %v405 = vsel %vm403, %v390, 0
          %v408 = vsel %vm403, %v391, 0
          %410 = vmatprep.subr.bf16.mxu0 0
          %411 = vmatpush1.bf16.msra.mxu0 0
          %412 = vmatprep.subr.bf16.mxu0 0
          %413 = vmatpush1.bf16.msra.mxu0 0
          %414 = vmatprep.subr.bf16.mxu0 0
          %415 = vmatpush1.bf16.msra.mxu0 0
          %416 = vmatprep.subr.bf16.mxu0 0
          %417 = vmatpush1.bf16.msra.mxu0 0
          %418 = vmatprep.subr.bf16.mxu0 0
          %419 = vmatpush1.bf16.msra.mxu0 0
          %420 = vmatprep.subr.bf16.mxu0 0
          %421 = vmatpush1.bf16.msra.mxu0 0
          %422 = vmatprep.subr.bf16.mxu0 0
          %423 = vmatpush1.bf16.msra.mxu0 0
          %424 = vmatprep.subr.bf16.mxu0 %v408
          %425 = vmatpush1.bf16.msra.mxu0 %v405
          %426 = vmatprep.subr.bf16.mxu0 0
          %427 = vmatpush2.bf16.msra.mxu0 0
          %428 = vmatprep.subr.bf16.mxu0 0
          %429 = vmatpush2.bf16.msra.mxu0 0
          %430 = vmatprep.subr.bf16.mxu0 0
          %431 = vmatpush2.bf16.msra.mxu0 0
          %432 = vmatprep.subr.bf16.mxu0 0
          %433 = vmatpush2.bf16.msra.mxu0 0
          %434 = vmatprep.subr.bf16.mxu0 0
          %435 = vmatpush2.bf16.msra.mxu0 0
          %436 = vmatprep.subr.bf16.mxu0 0
          %437 = vmatpush2.bf16.msra.mxu0 0
          %438 = vmatprep.subr.bf16.mxu0 0
          %439 = vmatpush2.bf16.msra.mxu0 0
          %440 = vmatprep.subr.bf16.mxu0 0
          %441 = vmatpush2.bf16.msra.mxu0 0
          %442 = vmatprep.mubr.bf16.mxu0 0
          %443 = vmatmul.mubr.bf16.gmra.mxu0 %v401
          %v444 = vpop.f32.mrf.mxu0
          %v445 = vadd.f32 %v397, %v444
          %v446 = vpop.f32.mrf.mxu0
          %v447 = vadd.f32 %v397, %v446
          %v448 = vpop.f32.mrf.mxu0
          %v449 = vpop.f32.mrf.mxu0
          %450 = vdwg.mxu0
          %v451 = vld [vmem:[%s5] sm:$0x3]
          %v452 = vld [vmem:[%s6] sm:$0xf]
          %454 = vset.pattern.permute.xlu0 0
          %455 = vperm.xlu0 %454, %v452
          %v456 = vpop.permute.xlu0 %455
          %v459 = vsel %vm399, %v451, 0
          %461 = vmatprep.subr.bf16.mxu0 0
          %462 = vmatpush1.bf16.msra.mxu0 0
          %463 = vmatprep.subr.bf16.mxu0 0
          %464 = vmatpush1.bf16.msra.mxu0 0
          %465 = vmatprep.subr.bf16.mxu0 0
          %466 = vmatpush1.bf16.msra.mxu0 0
          %467 = vmatprep.subr.bf16.mxu0 0
          %468 = vmatpush1.bf16.msra.mxu0 0
          %469 = vmatprep.subr.bf16.mxu0 0
          %470 = vmatpush1.bf16.msra.mxu0 0
          %471 = vmatprep.subr.bf16.mxu0 0
          %472 = vmatpush1.bf16.msra.mxu0 0
          %473 = vmatprep.subr.bf16.mxu0 0
          %474 = vmatpush1.bf16.msra.mxu0 0
          %475 = vmatprep.subr.bf16.mxu0 %v408
          %476 = vmatpush1.bf16.msra.mxu0 %v405
          %477 = vmatprep.subr.bf16.mxu0 0
          %478 = vmatpush2.bf16.msra.mxu0 0
          %479 = vmatprep.subr.bf16.mxu0 0
          %480 = vmatpush2.bf16.msra.mxu0 0
          %481 = vmatprep.subr.bf16.mxu0 0
          %482 = vmatpush2.bf16.msra.mxu0 0
          %483 = vmatprep.subr.bf16.mxu0 0
          %484 = vmatpush2.bf16.msra.mxu0 0
          %485 = vmatprep.subr.bf16.mxu0 0
          %486 = vmatpush2.bf16.msra.mxu0 0
          %487 = vmatprep.subr.bf16.mxu0 0
          %488 = vmatpush2.bf16.msra.mxu0 0
          %489 = vmatprep.subr.bf16.mxu0 0
          %490 = vmatpush2.bf16.msra.mxu0 0
          %491 = vmatprep.subr.bf16.mxu0 0
          %492 = vmatpush2.bf16.msra.mxu0 0
          %493 = vmatprep.mubr.bf16.mxu0 0
          %494 = vmatmul.mubr.bf16.gmra.mxu0 %v459
          %v495 = vpop.f32.mrf.mxu0
          %v496 = vadd.f32 %v456, %v495
          %v497 = vpop.f32.mrf.mxu0
          %v498 = vadd.f32 %v456, %v497
          %v499 = vpop.f32.mrf.mxu0
          %v500 = vpop.f32.mrf.mxu0
          %501 = vdwg.mxu0
          %vm502 = vcmask 1043456
          %v503 = vsel %vm502, %v445, 0.0
          %v504 = vrot.slane %v503, 4
          %v505 = vadd.f32 %v503, %v504
          %v506 = vrot.slane %v505, 2
          %v507 = vadd.f32 %v505, %v506
          %v508 = vrot.slane %v507, 1
          %v509 = vadd.f32 %v507, %v508
          %v510 = vsel %vm502, %v447, 0.0
          %v511 = vrot.slane %v510, 4
          %v512 = vadd.f32 %v510, %v511
          %v513 = vrot.slane %v512, 2
          %v514 = vadd.f32 %v512, %v513
          %v515 = vrot.slane %v514, 1
          %v516 = vadd.f32 %v514, %v515
          %v517 = vrcp.pop 4.0
          %v518 = vmul.f32 %v509, %v517
          %v519 = vmul.f32 %v516, %v517
          %v520 = vsub.f32 %v445, %v518
          %v521 = vsub.f32 %v447, %v519
          %v522 = vmul.f32 %v520, %v520
          %v523 = vmul.f32 %v521, %v521
          %v524 = vsel %vm502, %v522, 0.0
          %v525 = vrot.slane %v524, 4
          %v526 = vadd.f32 %v524, %v525
          %v527 = vrot.slane %v526, 2
          %v528 = vadd.f32 %v526, %v527
          %v529 = vrot.slane %v528, 1
          %v530 = vadd.f32 %v528, %v529
          %v531 = vsel %vm502, %v523, 0.0
          %v532 = vrot.slane %v531, 4
          %v533 = vadd.f32 %v531, %v532
          %v534 = vrot.slane %v533, 2
          %v535 = vadd.f32 %v533, %v534
          %v536 = vrot.slane %v535, 1
          %v537 = vadd.f32 %v535, %v536
          %v538 = vadd.f32 %v530, 1e-07
          %v539 = vadd.f32 %v537, 1e-07
          %v540 = vrcp.pop %v538
          %v541 = vrcp.pop %v539
          %v542 = vmul.f32 %v522, %v540
          %v543 = vmul.f32 %v523, %v541
          %v544 = vld [vmem:[#allocation2] sm:$0xf]
          %v545 = vpack.c.bf16 %v542, %v542
          %v546 = vpack.c.bf16 %v543, %v543
          %v547 = vpack.c.bf16 %v496, %v496
          %v548 = vpack.c.bf16 %v498, %v498
          %549 = vmatprep.subr.bf16.mxu0 0
          %550 = vmatpush1.bf16.xpose.msra.mxu0 0
          %551 = vmatprep.subr.bf16.mxu0 0
          %552 = vmatpush1.bf16.xpose.msra.mxu0 0
          %553 = vmatprep.subr.bf16.mxu0 0
          %554 = vmatpush1.bf16.xpose.msra.mxu0 0
          %555 = vmatprep.subr.bf16.mxu0 0
          %556 = vmatpush1.bf16.xpose.msra.mxu0 0
          %557 = vmatprep.subr.bf16.mxu0 0
          %558 = vmatpush1.bf16.xpose.msra.mxu0 0
          %559 = vmatprep.subr.bf16.mxu0 0
          %560 = vmatpush1.bf16.xpose.msra.mxu0 0
          %561 = vmatprep.subr.bf16.mxu0 0
          %562 = vmatpush1.bf16.xpose.msra.mxu0 0
          %563 = vmatprep.subr.bf16.mxu0 %v548
          %564 = vmatpush1.bf16.xpose.msra.mxu0 %v547
          %565 = vmatprep.subr.bf16.mxu0 0
          %566 = vmatpush2.bf16.xpose.msra.mxu0 0
          %567 = vmatprep.subr.bf16.mxu0 0
          %568 = vmatpush2.bf16.xpose.msra.mxu0 0
          %569 = vmatprep.subr.bf16.mxu0 0
          %570 = vmatpush2.bf16.xpose.msra.mxu0 0
          %571 = vmatprep.subr.bf16.mxu0 0
          %572 = vmatpush2.bf16.xpose.msra.mxu0 0
          %573 = vmatprep.subr.bf16.mxu0 0
          %574 = vmatpush2.bf16.xpose.msra.mxu0 0
          %575 = vmatprep.subr.bf16.mxu0 0
          %576 = vmatpush2.bf16.xpose.msra.mxu0 0
          %577 = vmatprep.subr.bf16.mxu0 0
          %578 = vmatpush2.bf16.xpose.msra.mxu0 0
          %579 = vmatprep.subr.bf16.mxu0 0
          %580 = vmatpush2.bf16.xpose.msra.mxu0 0
          %581 = vmatprep.mubr.bf16.mxu0 %v546
          %582 = vmatmul.mubr.bf16.gmra.mxu0 %v545
          %v583 = vpop.f32.mrf.mxu0
          %v584 = vadd.f32 0.0, %v583
          %v585 = vpop.f32.mrf.mxu0
          %v586 = vpop.f32.mrf.mxu0
          %v587 = vpop.f32.mrf.mxu0
          %588 = vdwg.mxu0
          %v589 = vadd.f32 %v544, %v584
          %vm590 = vcmask 27648
          %591 = vst.msk [vmem:[#allocation2] sm:$0xf] %vm590, %v589
          %v592 = vld [vmem:[#allocation3] sm:$0xf]
          %v593 = vmul.f32 %v542, %v542
          %v594 = vmul.f32 %v543, %v543
          %v595 = vsel %vm502, %v593, 0.0
          %v596 = vsel %vm502, %v594, 0.0
          %v597 = vadd.f32 %v595, %v596
          %598 = vadd.xlane.f32.xlu0 %v597
          %v599 = vpop.xlane.xlu0 %598
          %v600 = vadd.f32 %v592, %v599
          %vm601 = vcmask 3072
          %602 = vst.msk [vmem:[#allocation3] sm:$0xf] %vm601, %v600
        $region64: #{tpu_custom_call.1} parent=55 // pred_fallthru
          _
        %p603 = scmp.eq.s32.totalorder %s29, 1
        // Predicated region
        $region65: #{tpu_custom_call.1} parent=55 // pred_check
          %p604 = pneg %p603
        $region66: #{tpu_custom_call.1} parent=55 // pred_check_branch
          %606 = sbr.rel (%p604) target = $region68
        $region67: #{tpu_custom_call.1} parent=55 // pred_region
          // Predicated region
          $region69: #{tpu_custom_call.1} parent=67 // pred_check
            %p607 = pneg %p374
          $region70: #{tpu_custom_call.1} parent=67 // pred_check_branch
            %609 = sbr.rel (%p607) target = $region72
          $region71: #{tpu_custom_call.1} parent=67 // pred_region
            %v610 = vld [vmem:[#allocation3] sm:$0xf]
            %v611 = vmax.f32 %v610, 1e-24
            %v612 = vrsqrt.pop %v611
            %v613 = vld [vmem:[#allocation2] sm:$0xf]
            %v614 = vmul.f32 %v612, 0.0625
            %616 = vset.pattern.permute.xlu0 0
            %617 = vperm.xlu0 %616, %v614
            %v618 = vpop.permute.xlu0 %617
            %v620 = vmul.f32 %v613, %v618
            %v621 = vpack.c.bf16 %v620, %v620
            %vm622 = vcmask 25600
            %623 = vst.msk [vmem:[#allocation4] sm:$0x3] %vm622, %v621
          $region72: #{tpu_custom_call.1} parent=67 // pred_fallthru
            _
          %v624 = vld [vmem:[%s368] sm:$0xff]
          %v626 = vcombine.high %v624, %v624
          %v628 = vpack.c.bf16 %v624, %v624
          %v629 = vpack.c.bf16 %v626, %v626
          %v630 = vld [vmem:[%s5] sm:$0x3]
          %v631 = vld [vmem:[%s6] sm:$0xf]
          %633 = vset.pattern.permute.xlu0 0
          %634 = vperm.xlu0 %633, %v631
          %v635 = vpop.permute.xlu0 %634
          %vm637 = vcmask 31744
          %v639 = vsel %vm637, %v630, 0
          %vm641 = vcmask 1041408
          %v643 = vsel %vm641, %v628, 0
          %v646 = vsel %vm641, %v629, 0
          %648 = vmatprep.subr.bf16.mxu0 0
          %649 = vmatpush1.bf16.msra.mxu0 0
          %650 = vmatprep.subr.bf16.mxu0 0
          %651 = vmatpush1.bf16.msra.mxu0 0
          %652 = vmatprep.subr.bf16.mxu0 0
          %653 = vmatpush1.bf16.msra.mxu0 0
          %654 = vmatprep.subr.bf16.mxu0 0
          %655 = vmatpush1.bf16.msra.mxu0 0
          %656 = vmatprep.subr.bf16.mxu0 0
          %657 = vmatpush1.bf16.msra.mxu0 0
          %658 = vmatprep.subr.bf16.mxu0 0
          %659 = vmatpush1.bf16.msra.mxu0 0
          %660 = vmatprep.subr.bf16.mxu0 0
          %661 = vmatpush1.bf16.msra.mxu0 0
          %662 = vmatprep.subr.bf16.mxu0 %v646
          %663 = vmatpush1.bf16.msra.mxu0 %v643
          %664 = vmatprep.subr.bf16.mxu0 0
          %665 = vmatpush2.bf16.msra.mxu0 0
          %666 = vmatprep.subr.bf16.mxu0 0
          %667 = vmatpush2.bf16.msra.mxu0 0
          %668 = vmatprep.subr.bf16.mxu0 0
          %669 = vmatpush2.bf16.msra.mxu0 0
          %670 = vmatprep.subr.bf16.mxu0 0
          %671 = vmatpush2.bf16.msra.mxu0 0
          %672 = vmatprep.subr.bf16.mxu0 0
          %673 = vmatpush2.bf16.msra.mxu0 0
          %674 = vmatprep.subr.bf16.mxu0 0
          %675 = vmatpush2.bf16.msra.mxu0 0
          %676 = vmatprep.subr.bf16.mxu0 0
          %677 = vmatpush2.bf16.msra.mxu0 0
          %678 = vmatprep.subr.bf16.mxu0 0
          %679 = vmatpush2.bf16.msra.mxu0 0
          %680 = vmatprep.mubr.bf16.mxu0 0
          %681 = vmatmul.mubr.bf16.gmra.mxu0 %v639
          %v682 = vpop.f32.mrf.mxu0
          %v683 = vadd.f32 %v635, %v682
          %v684 = vpop.f32.mrf.mxu0
          %v685 = vadd.f32 %v635, %v684
          %v686 = vpop.f32.mrf.mxu0
          %v687 = vpop.f32.mrf.mxu0
          %688 = vdwg.mxu0
          %v689 = vld [vmem:[%s1] sm:$0x3]
          %v690 = vld [vmem:[%s2] sm:$0xf]
          %692 = vset.pattern.permute.xlu0 0
          %693 = vperm.xlu0 %692, %v690
          %v694 = vpop.permute.xlu0 %693
          %v697 = vsel %vm637, %v689, 0
          %699 = vmatprep.subr.bf16.mxu0 0
          %700 = vmatpush1.bf16.msra.mxu0 0
          %701 = vmatprep.subr.bf16.mxu0 0
          %702 = vmatpush1.bf16.msra.mxu0 0
          %703 = vmatprep.subr.bf16.mxu0 0
          %704 = vmatpush1.bf16.msra.mxu0 0
          %705 = vmatprep.subr.bf16.mxu0 0
          %706 = vmatpush1.bf16.msra.mxu0 0
          %707 = vmatprep.subr.bf16.mxu0 0
          %708 = vmatpush1.bf16.msra.mxu0 0
          %709 = vmatprep.subr.bf16.mxu0 0
          %710 = vmatpush1.bf16.msra.mxu0 0
          %711 = vmatprep.subr.bf16.mxu0 0
          %712 = vmatpush1.bf16.msra.mxu0 0
          %713 = vmatprep.subr.bf16.mxu0 %v646
          %714 = vmatpush1.bf16.msra.mxu0 %v643
          %715 = vmatprep.subr.bf16.mxu0 0
          %716 = vmatpush2.bf16.msra.mxu0 0
          %717 = vmatprep.subr.bf16.mxu0 0
          %718 = vmatpush2.bf16.msra.mxu0 0
          %719 = vmatprep.subr.bf16.mxu0 0
          %720 = vmatpush2.bf16.msra.mxu0 0
          %721 = vmatprep.subr.bf16.mxu0 0
          %722 = vmatpush2.bf16.msra.mxu0 0
          %723 = vmatprep.subr.bf16.mxu0 0
          %724 = vmatpush2.bf16.msra.mxu0 0
          %725 = vmatprep.subr.bf16.mxu0 0
          %726 = vmatpush2.bf16.msra.mxu0 0
          %727 = vmatprep.subr.bf16.mxu0 0
          %728 = vmatpush2.bf16.msra.mxu0 0
          %729 = vmatprep.subr.bf16.mxu0 0
          %730 = vmatpush2.bf16.msra.mxu0 0
          %731 = vmatprep.mubr.bf16.mxu0 0
          %732 = vmatmul.mubr.bf16.gmra.mxu0 %v697
          %v733 = vpop.f32.mrf.mxu0
          %v734 = vadd.f32 %v694, %v733
          %v735 = vpop.f32.mrf.mxu0
          %v736 = vadd.f32 %v694, %v735
          %v737 = vpop.f32.mrf.mxu0
          %v738 = vpop.f32.mrf.mxu0
          %739 = vdwg.mxu0
          %vm740 = vcmask 1043456
          %v741 = vsel %vm740, %v734, 0.0
          %v742 = vrot.slane %v741, 4
          %v743 = vadd.f32 %v741, %v742
          %v744 = vrot.slane %v743, 2
          %v745 = vadd.f32 %v743, %v744
          %v746 = vrot.slane %v745, 1
          %v747 = vadd.f32 %v745, %v746
          %v748 = vsel %vm740, %v736, 0.0
          %v749 = vrot.slane %v748, 4
          %v750 = vadd.f32 %v748, %v749
          %v751 = vrot.slane %v750, 2
          %v752 = vadd.f32 %v750, %v751
          %v753 = vrot.slane %v752, 1
          %v754 = vadd.f32 %v752, %v753
          %v755 = vrcp.pop 4.0
          %v756 = vmul.f32 %v747, %v755
          %v757 = vmul.f32 %v754, %v755
          %v758 = vsub.f32 %v734, %v756
          %v759 = vsub.f32 %v736, %v757
          %v760 = vmul.f32 %v758, %v758
          %v761 = vmul.f32 %v759, %v759
          %v762 = vmul.f32 %v760, %v760
          %v763 = vmul.f32 %v761, %v761
          %v764 = vsel %vm740, %v762, 0.0
          %v765 = vrot.slane %v764, 4
          %v766 = vadd.f32 %v764, %v765
          %v767 = vrot.slane %v766, 2
          %v768 = vadd.f32 %v766, %v767
          %v769 = vrot.slane %v768, 1
          %v770 = vadd.f32 %v768, %v769
          %v771 = vsel %vm740, %v763, 0.0
          %v772 = vrot.slane %v771, 4
          %v773 = vadd.f32 %v771, %v772
          %v774 = vrot.slane %v773, 2
          %v775 = vadd.f32 %v773, %v774
          %v776 = vrot.slane %v775, 1
          %v777 = vadd.f32 %v775, %v776
          %v778 = vmax.f32 %v770, 1e-24
          %v779 = vmax.f32 %v777, 1e-24
          %v780 = vrsqrt.pop %v778
          %v781 = vrsqrt.pop %v779
          %v782 = vmul.f32 %v760, %v780
          %v783 = vmul.f32 %v761, %v781
          %v784 = vld [vmem:[#allocation4] sm:$0x3]
          %v785 = vpack.c.bf16 %v782, %v782
          %v786 = vpack.c.bf16 %v783, %v783
          %787 = vxpose.xlu0.c.b16.start [1/8] %v784, 128
          %788 = vxpose.xlu0.c.b16.cont [2/8] 0, 128
          %789 = vxpose.xlu0.c.b16.cont [3/8] 0, 128
          %790 = vxpose.xlu0.c.b16.cont [4/8] 0, 128
          %791 = vxpose.xlu0.c.b16.cont [5/8] 0, 128
          %792 = vxpose.xlu0.c.b16.cont [6/8] 0, 128
          %793 = vxpose.xlu0.c.b16.cont [7/8] 0, 128
          %794 = vxpose.xlu0.c.b16.end [8/8] 0, 128
          %v795 = vpop.trf.xlu0
          %v796 = vpop.trf.xlu0
          %v797 = vpop.trf.xlu0
          %v798 = vpop.trf.xlu0
          %v799 = vpop.trf.xlu0
          %v800 = vpop.trf.xlu0
          %v801 = vpop.trf.xlu0
          %v802 = vpop.trf.xlu0
          %v804 = vsel %vm637, %v795, 0
          %v807 = vsel %vm641, %v785, 0
          %v810 = vsel %vm641, %v786, 0
          %812 = vmatprep.subr.bf16.mxu0 0
          %813 = vmatpush1.bf16.msra.mxu0 0
          %814 = vmatprep.subr.bf16.mxu0 0
          %815 = vmatpush1.bf16.msra.mxu0 0
          %816 = vmatprep.subr.bf16.mxu0 0
          %817 = vmatpush1.bf16.msra.mxu0 0
          %818 = vmatprep.subr.bf16.mxu0 0
          %819 = vmatpush1.bf16.msra.mxu0 0
          %820 = vmatprep.subr.bf16.mxu0 0
          %821 = vmatpush1.bf16.msra.mxu0 0
          %822 = vmatprep.subr.bf16.mxu0 0
          %823 = vmatpush1.bf16.msra.mxu0 0
          %824 = vmatprep.subr.bf16.mxu0 0
          %825 = vmatpush1.bf16.msra.mxu0 0
          %826 = vmatprep.subr.bf16.mxu0 %v810
          %827 = vmatpush1.bf16.msra.mxu0 %v807
          %828 = vmatprep.subr.bf16.mxu0 0
          %829 = vmatpush2.bf16.msra.mxu0 0
          %830 = vmatprep.subr.bf16.mxu0 0
          %831 = vmatpush2.bf16.msra.mxu0 0
          %832 = vmatprep.subr.bf16.mxu0 0
          %833 = vmatpush2.bf16.msra.mxu0 0
          %834 = vmatprep.subr.bf16.mxu0 0
          %835 = vmatpush2.bf16.msra.mxu0 0
          %836 = vmatprep.subr.bf16.mxu0 0
          %837 = vmatpush2.bf16.msra.mxu0 0
          %838 = vmatprep.subr.bf16.mxu0 0
          %839 = vmatpush2.bf16.msra.mxu0 0
          %840 = vmatprep.subr.bf16.mxu0 0
          %841 = vmatpush2.bf16.msra.mxu0 0
          %842 = vmatprep.subr.bf16.mxu0 0
          %843 = vmatpush2.bf16.msra.mxu0 0
          %844 = vmatprep.mubr.bf16.mxu0 0
          %845 = vmatmul.mubr.bf16.gmra.mxu0 %v804
          %v846 = vpop.f32.mrf.mxu0
          %v847 = vadd.f32 0.0, %v846
          %v848 = vpop.f32.mrf.mxu0
          %v849 = vadd.f32 0.0, %v848
          %v850 = vpop.f32.mrf.mxu0
          %v851 = vpop.f32.mrf.mxu0
          %852 = vdwg.mxu0
          %v853 = vadd.f32 %v683, %v847
          %v854 = vadd.f32 %v685, %v849
          %v855 = vld [vmem:[%s7] sm:$0x3]
          %v856 = vpack.c.bf16 %v853, %v853
          %v857 = vpack.c.bf16 %v854, %v854
          %v858 = vld [vmem:[%s8] sm:$0xf]
          %860 = vset.pattern.permute.xlu0 0
          %861 = vperm.xlu0 %860, %v858
          %v862 = vpop.permute.xlu0 %861
          %v865 = vsel %vm637, %v855, 0
          %v868 = vsel %vm641, %v856, 0
          %v871 = vsel %vm641, %v857, 0
          %873 = vmatprep.subr.bf16.mxu0 0
          %874 = vmatpush1.bf16.msra.mxu0 0
          %875 = vmatprep.subr.bf16.mxu0 0
          %876 = vmatpush1.bf16.msra.mxu0 0
          %877 = vmatprep.subr.bf16.mxu0 0
          %878 = vmatpush1.bf16.msra.mxu0 0
          %879 = vmatprep.subr.bf16.mxu0 0
          %880 = vmatpush1.bf16.msra.mxu0 0
          %881 = vmatprep.subr.bf16.mxu0 0
          %882 = vmatpush1.bf16.msra.mxu0 0
          %883 = vmatprep.subr.bf16.mxu0 0
          %884 = vmatpush1.bf16.msra.mxu0 0
          %885 = vmatprep.subr.bf16.mxu0 0
          %886 = vmatpush1.bf16.msra.mxu0 0
          %887 = vmatprep.subr.bf16.mxu0 %v871
          %888 = vmatpush1.bf16.msra.mxu0 %v868
          %889 = vmatprep.subr.bf16.mxu0 0
          %890 = vmatpush2.bf16.msra.mxu0 0
          %891 = vmatprep.subr.bf16.mxu0 0
          %892 = vmatpush2.bf16.msra.mxu0 0
          %893 = vmatprep.subr.bf16.mxu0 0
          %894 = vmatpush2.bf16.msra.mxu0 0
          %895 = vmatprep.subr.bf16.mxu0 0
          %896 = vmatpush2.bf16.msra.mxu0 0
          %897 = vmatprep.subr.bf16.mxu0 0
          %898 = vmatpush2.bf16.msra.mxu0 0
          %899 = vmatprep.subr.bf16.mxu0 0
          %900 = vmatpush2.bf16.msra.mxu0 0
          %901 = vmatprep.subr.bf16.mxu0 0
          %902 = vmatpush2.bf16.msra.mxu0 0
          %903 = vmatprep.subr.bf16.mxu0 0
          %904 = vmatpush2.bf16.msra.mxu0 0
          %905 = vmatprep.mubr.bf16.mxu0 0
          %906 = vmatmul.mubr.bf16.gmra.mxu0 %v865
          %v907 = vpop.f32.mrf.mxu0
          %v908 = vadd.f32 %v862, %v907
          %v909 = vpop.f32.mrf.mxu0
          %v910 = vadd.f32 %v862, %v909
          %v911 = vpop.f32.mrf.mxu0
          %v912 = vpop.f32.mrf.mxu0
          %913 = vdwg.mxu0
          %v916 = vcombine.low %v908, %v910
          %918 = vst [vmem:[%s359] sm:$0xff] %v916
        $region68: #{tpu_custom_call.1} parent=55 // pred_fallthru
          _
        %s919 = sand.u32 %s250, 1
        %s920 = scalar_lea.sflag [#allocation6], %s919
        %s921 = sand.u32 %s250, 1
        %s922 = smul.addr %s921, 8
        %s923 = scalar_lea.vmem [#allocation5], %s922
        // Predicated region
        $region73: #{tpu_custom_call.1} parent=55 // pred_check
          %p924 = pneg %p260
        $region74: #{tpu_custom_call.1} parent=55 // pred_check_branch
          %926 = sbr.rel (%p924) target = $region76
        $region75: #{tpu_custom_call.1} parent=55 // pred_region
          %s927 = smul.u32 %s29, %s30
          %s928 = smul.u32 2, %s927
          %s930 = ssub.s32 128, 128
          %931 = vsyncadd %s920, %s930
          %s932 = smul.addr %s28, 2
          %s933 = sadd.s32 %s928, %s932
          %s934 = smul.addr %s933, 64
          %s935 = scalar_lea.hbm %s9, %s934
          %s937 = sshll.u32 %s923, 4
          %s938 = int_to_ptr.vmem [resolvable:$true] %s937
          %940 = dma.vmem_to_hbm [thread:$0]  %s938, 128, %s935, %s920
        $region76: #{tpu_custom_call.1} parent=55 // pred_fallthru
          _
      $region56: #{tpu_custom_call.1} parent=5 // pred_fallthru
        _
      %p941 = scmp.le.s32.totalorder 2, %s18
      // Predicated region
      $region77: #{tpu_custom_call.1} parent=5 // pred_check
        %p942 = pneg %p941
      $region78: #{tpu_custom_call.1} parent=5 // pred_check_branch
        %944 = sbr.rel (%p942) target = $region80
      $region79: #{tpu_custom_call.1} parent=5 // pred_region
        %s945 = ssub.s32 %s18, 2
        // Predicated region
        $region81: #{tpu_custom_call.1} parent=79 // pred_check
          %p946 = pneg %p266
        $region82: #{tpu_custom_call.1} parent=79 // pred_check_branch
          %948 = sbr.rel (%p946) target = $region84
        $region83: #{tpu_custom_call.1} parent=79 // pred_region
          %s949 = sand.u32 %s251, 1
          %s950 = scalar_lea.sflag [#allocation6], %s949
          %s951 = sand.u32 %s251, 1
          %s952 = smul.addr %s951, 8
          %s953 = scalar_lea.vmem [#allocation5], %s952
          %954 = dma.done %s950, 128
        $region84: #{tpu_custom_call.1} parent=79 // pred_fallthru
          _
      $region80: #{tpu_custom_call.1} parent=5 // pred_fallthru
        _
    $region6: #{tpu_custom_call.1} parent=1 // loop_footer
      %s22 = sadd.s32 1, %s18
    $region7: #{tpu_custom_call.1} parent=1 // loop_footer_branch
      %17 = sbr.rel target = $region3
    $region8: #{tpu_custom_call.1} parent=1 // loop_exit
      _
    %955 = vsyncpa [#allocation6], 1
    %s956 = scalar_lea.sflag [#allocation6], 1
    %957 = vsyncpa %s956, 1

</llo_original>
